<compile_context>
chip_gen: v6e
topology: v6e:2x2x1
jax: 0.10.0
libtpu: 0.0.40
codegen_flags: <defaults>
</compile_context>

<pallas_src>
import jax
import jax.numpy as jnp
from jax.experimental import pallas as pl
from jax.experimental.pallas import tpu as pltpu


def lstm_kernel(x_ref, wih_ref, whh_ref, b_ref, out_ref, gx_ref):
    # x_ref:   (T, Bt, D)  time-major batch tile of the input
    # wih_ref: (D, 4H)     input->gates weight (W_ih^T), grid-resident
    # whh_ref: (H, 4H)     hidden->gates weight (W_hh^T), grid-resident
    # b_ref:   (1, 4H)     combined bias (b_ih + b_hh), f32
    # out_ref: (Bt, H)     final hidden state h_T for this batch tile
    # gx_ref:  (T, Bt, 4H) f32 VMEM scratch for the hoisted input projection
    T, Bt, D = x_ref.shape
    H = whh_ref.shape[0]
    G = 4 * H

    # ---- Phase 1: hoisted input projection, staged once in VMEM scratch. ----
    # Off the serial critical path; only clean leading-axis ref indexing.
    wih = wih_ref[...]                                          # native dtype
    bias = jnp.broadcast_to(b_ref[...], (Bt, G)).astype(jnp.float32)  # hoisted

    @pl.loop(0, T)
    def _(t):
        gx_ref[t] = (
            jnp.dot(x_ref[t], wih, preferred_element_type=jnp.float32) + bias
        )

    # ---- Phase 2: serial recurrence; only h @ W_hh is on the critical path. --
    whh = whh_ref[...]                                          # native dtype

    def gate_math(gates, c):
        # Full-width transcendentals (EUP slot is free); narrow lane slices
        # only on the already-activated values.
        sig = jax.nn.sigmoid(gates)                             # (Bt, 4H)
        th = jnp.tanh(gates)                                    # (Bt, 4H)
        i_g = sig[:, 0 * H:1 * H]
        f_g = sig[:, 1 * H:2 * H]
        g_g = th[:, 2 * H:3 * H]
        o_g = sig[:, 3 * H:4 * H]
        c_new = f_g * c + i_g * g_g
        h_new = o_g * jnp.tanh(c_new)
        return h_new, c_new

    # t = 0: h == c == 0 -> skip the recurrent matmul and the f*c term.
    gates0 = gx_ref[0]
    sig0 = jax.nn.sigmoid(gates0)
    th0 = jnp.tanh(gates0)
    c = sig0[:, 0 * H:1 * H] * th0[:, 2 * H:3 * H]              # i * g
    h = sig0[:, 3 * H:4 * H] * jnp.tanh(c)                      # o * tanh(c)

    # t = 1 .. T-1 (fully unrolled scan: bounded live ranges + LLO visibility).
    def body(t, carry):
        h, c = carry
        hm = h if h.dtype == whh.dtype else h.astype(whh.dtype)  # cast only if needed
        gates = gx_ref[t] + jnp.dot(hm, whh, preferred_element_type=jnp.float32)
        return gate_math(gates, c)

    h, c = jax.lax.fori_loop(1, T, body, (h, c), unroll=True)

    out_ref[...] = h.astype(out_ref.dtype)


def _tile_footprint_bytes(bt, T, D, H, x_bytes, w_bytes, out_bytes):
    """Per-grid-step VMEM footprint: double-buffered x tile + f32 gx scratch
    + (conservatively double-buffered) weights + bias + double-buffered out."""
    G = 4 * H
    return (2 * T * bt * D * x_bytes
            + T * bt * G * 4
            + 2 * (D + H) * G * w_bytes
            + 2 * G * 4
            + 2 * bt * H * out_bytes)


def _pick_batch_tile(B, T, D, H, x_bytes, w_bytes, out_bytes,
                     vmem_budget_bytes=24 * 1024 * 1024):
    """VMEM-aware batch tile (fits v7x's 64 MiB / 32 MiB scoped default with
    headroom).  Only exact divisors of B are used (no padded last block).
    Prefers >= 2 grid steps when B >= 16 so the "parallel" grid axis can shard
    across v7x's two TensorCores (no-op on single-TC v5e/v6e)."""
    def fp(bt):
        return _tile_footprint_bytes(bt, T, D, H, x_bytes, w_bytes, out_bytes)

    cands = [B] + [t for t in range(8, B, 8) if B % t == 0]
    fitting = [t for t in cands if fp(t) <= vmem_budget_bytes]
    if not fitting:
        return min(cands, key=fp)
    bt = max(fitting)
    if B >= 16 and bt == B:
        smaller = [t for t in fitting if t < B]
        if smaller:
            bt = max(smaller)
    return bt


def expert_lstm_forward(x, w_ih, w_hh, b_ih, b_hh):
    """ExpertLSTM.forward: single-layer batch_first nn.LSTM; returns hidden[-1].

    x: (B, T, D).  w_ih: (4H, D), w_hh: (4H, H), biases (4H,) with PyTorch gate
    order [i, f, g, o].  Matmul operands run in x's dtype (pass bf16 for the
    peak MXU path); gate/c/h math and accumulation stay f32.
    """
    B, T, D = x.shape
    H = w_hh.shape[1]
    G = 4 * H

    mm_dtype = x.dtype
    wih_t = jnp.transpose(w_ih, (1, 0)).astype(mm_dtype)        # (D, 4H)
    whh_t = jnp.transpose(w_hh, (1, 0)).astype(mm_dtype)        # (H, 4H)
    b = (b_ih + b_hh).astype(jnp.float32).reshape(1, G)         # combined bias

    # Time-major layout so every per-step access in the kernel is a clean
    # leading-axis index (no in-kernel reshape / relayout of the tile).
    x_tm = jnp.transpose(x, (1, 0, 2))                          # (T, B, D)

    x_bytes = jnp.dtype(mm_dtype).itemsize
    out_bytes = x_bytes
    bt = _pick_batch_tile(B, T, D, H, x_bytes, x_bytes, out_bytes)
    nb = pl.cdiv(B, bt)

    fp = _tile_footprint_bytes(bt, T, D, H, x_bytes, x_bytes, out_bytes)
    vmem_limit = int(min(64 * 2**20, max(32 * 2**20, 2 * fp)))

    cost = pl.CostEstimate(
        flops=2 * B * T * D * G + 2 * B * T * H * G,
        transcendentals=B * T * (2 * G + H),
        bytes_accessed=(B * T * D * x_bytes + (D + H) * G * x_bytes
                        + G * 4 + B * H * out_bytes),
    )

    return pl.pallas_call(
        lstm_kernel,
        out_shape=jax.ShapeDtypeStruct((B, H), x.dtype),
        grid=(nb,),
        in_specs=[
            pl.BlockSpec((T, bt, D), lambda i: (0, i, 0)),      # batch-tiled x (time-major)
            pl.BlockSpec((D, G), lambda i: (0, 0)),             # weights stay VMEM-resident
            pl.BlockSpec((H, G), lambda i: (0, 0)),
            pl.BlockSpec((1, G), lambda i: (0, 0)),
        ],
        out_specs=pl.BlockSpec((bt, H), lambda i: (i, 0)),
        scratch_shapes=[pltpu.VMEM((T, bt, G), jnp.float32)],   # staged gx
        compiler_params=pltpu.CompilerParams(
            # Batch tiles are independent -> shards across v7x's two TensorCores.
            dimension_semantics=("parallel",),
            vmem_limit_bytes=vmem_limit,
        ),
        cost_estimate=cost,
    )(x_tm, wih_t, whh_t, b)


def lstm_reference(x, w_ih, w_hh, b_ih, b_hh):
    """Pure-JAX reference matching torch.nn.LSTM forward (hidden[-1])."""
    B, T, D = x.shape
    H = w_hh.shape[1]
    xf = x.astype(jnp.float32)
    h = jnp.zeros((B, H), jnp.float32)
    c = jnp.zeros((B, H), jnp.float32)
    for t in range(T):
        gates = xf[:, t, :] @ w_ih.T + h @ w_hh.T + (b_ih + b_hh)
        i_g = jax.nn.sigmoid(gates[:, 0 * H:1 * H])
        f_g = jax.nn.sigmoid(gates[:, 1 * H:2 * H])
        g_g = jnp.tanh(gates[:, 2 * H:3 * H])
        o_g = jax.nn.sigmoid(gates[:, 3 * H:4 * H])
        c = f_g * c + i_g * g_g
        h = o_g * jnp.tanh(c)
    return h


if __name__ == "__main__":
    # Small shapes consistent with the module: batch=2, seq=8, input=16, hidden=32
    B, T, D, H = 2, 8, 16, 32

    key = jax.random.PRNGKey(0)
    kx, k1, k2, k3, k4 = jax.random.split(key, 5)

    # PyTorch LSTM default init: U(-1/sqrt(H), 1/sqrt(H))
    bound = 1.0 / jnp.sqrt(jnp.float32(H))
    w_ih = jax.random.uniform(k1, (4 * H, D), jnp.float32, -bound, bound)
    w_hh = jax.random.uniform(k2, (4 * H, H), jnp.float32, -bound, bound)
    b_ih = jax.random.uniform(k3, (4 * H,), jnp.float32, -bound, bound)
    b_hh = jax.random.uniform(k4, (4 * H,), jnp.float32, -bound, bound)

    x = jax.random.normal(kx, (B, T, D), jnp.float32)

    ref = lstm_reference(x, w_ih, w_hh, b_ih, b_hh)

    # f32 path: strict check.
    out = jax.block_until_ready(expert_lstm_forward(x, w_ih, w_hh, b_ih, b_hh))
    assert out.shape == (B, H)
    assert jnp.allclose(out, ref, atol=1e-5, rtol=1e-5)

    # bf16 fast path (peak MXU on v5e/v6e/v7x): recurrent h is re-quantized each
    # step, so compare with a loose tolerance.
    out_bf16 = jax.block_until_ready(
        expert_lstm_forward(x.astype(jnp.bfloat16), w_ih, w_hh, b_ih, b_hh))
    assert out_bf16.shape == (B, H)
    assert jnp.allclose(out_bf16.astype(jnp.float32), ref, atol=5e-2, rtol=5e-2)

    print("KERNEL_OK")
</pallas_src>

<mosaic_0001>
module attributes {stable_mosaic.version = 11 : i64} {
  func.func @lstm_kernel(%arg0: i32, %arg1: memref<8x2x16xf32, #tpu.memory_space<vmem>>, %arg2: memref<16x128xf32, #tpu.memory_space<vmem>>, %arg3: memref<32x128xf32, #tpu.memory_space<vmem>>, %arg4: memref<1x128xf32, #tpu.memory_space<vmem>>, %arg5: memref<2x32xf32, #tpu.memory_space<vmem>>, %arg6: memref<8x2x128xf32, #tpu.memory_space<vmem>>) attributes {dimension_semantics = [#tpu.dimension_semantics<parallel>], iteration_bounds = array<i64: 1>, scalar_prefetch = 0 : i64, scratch_operands = 1 : i64, tpu.core_type = #tpu.core_type<tc>, window_params = [{transform_indices = @transform_0, window_bounds = array<i64: 8, 2, 16>}, {pipeline_mode = #tpu.pipeline_mode<synchronous>, transform_indices = @transform_1, window_bounds = array<i64: 16, 128>}, {pipeline_mode = #tpu.pipeline_mode<synchronous>, transform_indices = @transform_2, window_bounds = array<i64: 32, 128>}, {pipeline_mode = #tpu.pipeline_mode<synchronous>, transform_indices = @transform_3, window_bounds = array<i64: 1, 128>}, {transform_indices = @transform_4, window_bounds = array<i64: 2, 32>}]} {
    %c0 = arith.constant 0 : index
    %c0_0 = arith.constant 0 : index
    %0 = vector.load %arg2[%c0, %c0_0] : memref<16x128xf32, #tpu.memory_space<vmem>>, vector<16x128xf32>
    %c0_1 = arith.constant 0 : index
    %c0_2 = arith.constant 0 : index
    %1 = vector.load %arg4[%c0_1, %c0_2] : memref<1x128xf32, #tpu.memory_space<vmem>>, vector<1x128xf32>
    %2 = vector.shape_cast %1 : vector<1x128xf32> to vector<1x128xf32>
    %3 = vector.broadcast %2 : vector<1x128xf32> to vector<2x128xf32>
    %c0_i32 = arith.constant 0 : i32
    %c8_i32 = arith.constant 8 : i32
    %4 = arith.addi %c0_i32, %c8_i32 : i32
    %c1_i32 = arith.constant 1 : i32
    scf.for %arg7 = %c0_i32 to %4 step %c1_i32  : i32 {
      %c1_i32_41 = arith.constant 1 : i32
      %161 = arith.muli %arg7, %c1_i32_41 : i32
      %c0_i32_42 = arith.constant 0 : i32
      %162 = arith.addi %c0_i32_42, %161 : i32
      %163 = arith.index_cast %162 : i32 to index
      %c0_43 = arith.constant 0 : index
      %c0_44 = arith.constant 0 : index
      %164 = vector.load %arg1[%163, %c0_43, %c0_44] : memref<8x2x16xf32, #tpu.memory_space<vmem>>, vector<1x2x16xf32>
      %165 = vector.shape_cast %164 : vector<1x2x16xf32> to vector<2x16xf32>
      %cst_45 = arith.constant dense<0.000000e+00> : vector<2x128xf32>
      %166 = tpu.matmul %165, %0, %cst_45 {dimension_numbers = #tpu.dot_dimension_numbers<[1], [0], [0], [1], [0, 0, 1, 1], [], []>} : vector<2x16xf32>, vector<16x128xf32>, vector<2x128xf32> -> vector<2x128xf32>
      %167 = arith.addf %166, %3 : vector<2x128xf32>
      %168 = arith.index_cast %162 : i32 to index
      %c0_46 = arith.constant 0 : index
      %c0_47 = arith.constant 0 : index
      %169 = vector.load %arg6[%168, %c0_46, %c0_47] : memref<8x2x128xf32, #tpu.memory_space<vmem>>, vector<1x2x128xf32>
      %170 = vector.shape_cast %169 : vector<1x2x128xf32> to vector<2x128xf32>
      %171 = vector.shape_cast %167 : vector<2x128xf32> to vector<1x2x128xf32>
      tpu.vector_store %arg6[%168, %c0_46, %c0_47], %171 {strides = array<i32>} : memref<8x2x128xf32, #tpu.memory_space<vmem>>, vector<1x2x128xf32>,
    }
    %c8_i32_3 = arith.constant 8 : i32
    %c0_4 = arith.constant 0 : index
    %c0_5 = arith.constant 0 : index
    %5 = vector.load %arg3[%c0_4, %c0_5] : memref<32x128xf32, #tpu.memory_space<vmem>>, vector<32x128xf32>
    %c0_6 = arith.constant 0 : index
    %c0_7 = arith.constant 0 : index
    %c0_8 = arith.constant 0 : index
    %6 = vector.load %arg6[%c0_6, %c0_7, %c0_8] : memref<8x2x128xf32, #tpu.memory_space<vmem>>, vector<1x2x128xf32>
    %7 = vector.shape_cast %6 : vector<1x2x128xf32> to vector<2x128xf32>
    %8 = arith.negf %7 : vector<2x128xf32>
    %9 = math.exp %8 : vector<2x128xf32>
    %cst = arith.constant 1.000000e+00 : f32
    %10 = vector.broadcast %cst : f32 to vector<2x128xf32>
    %11 = arith.addf %10, %9 : vector<2x128xf32>
    %12 = arith.divf %10, %11 : vector<2x128xf32>
    %13 = math.tanh %7 : vector<2x128xf32>
    %14 = vector.extract_strided_slice %12 {offsets = [0, 0], sizes = [2, 32], strides = [1, 1]} : vector<2x128xf32> to vector<2x32xf32>
    %15 = vector.extract_strided_slice %13 {offsets = [0, 64], sizes = [2, 32], strides = [1, 1]} : vector<2x128xf32> to vector<2x32xf32>
    %16 = arith.mulf %14, %15 : vector<2x32xf32>
    %17 = vector.extract_strided_slice %12 {offsets = [0, 96], sizes = [2, 32], strides = [1, 1]} : vector<2x128xf32> to vector<2x32xf32>
    %18 = math.tanh %16 : vector<2x32xf32>
    %19 = arith.mulf %17, %18 : vector<2x32xf32>
    %c1_i32_9 = arith.constant 1 : i32
    %20 = arith.index_cast %c1_i32_9 : i32 to index
    %c0_10 = arith.constant 0 : index
    %c0_11 = arith.constant 0 : index
    %21 = vector.load %arg6[%20, %c0_10, %c0_11] : memref<8x2x128xf32, #tpu.memory_space<vmem>>, vector<1x2x128xf32>
    %22 = vector.shape_cast %21 : vector<1x2x128xf32> to vector<2x128xf32>
    %cst_12 = arith.constant dense<0.000000e+00> : vector<2x128xf32>
    %23 = tpu.matmul %19, %5, %cst_12 {dimension_numbers = #tpu.dot_dimension_numbers<[1], [0], [0], [1], [0, 0, 1, 1], [], []>} : vector<2x32xf32>, vector<32x128xf32>, vector<2x128xf32> -> vector<2x128xf32>
    %24 = arith.addf %22, %23 : vector<2x128xf32>
    %25 = arith.negf %24 : vector<2x128xf32>
    %26 = math.exp %25 : vector<2x128xf32>
    %cst_13 = arith.constant 1.000000e+00 : f32
    %27 = vector.broadcast %cst_13 : f32 to vector<2x128xf32>
    %28 = arith.addf %27, %26 : vector<2x128xf32>
    %29 = arith.divf %27, %28 : vector<2x128xf32>
    %30 = math.tanh %24 : vector<2x128xf32>
    %31 = vector.extract_strided_slice %29 {offsets = [0, 0], sizes = [2, 32], strides = [1, 1]} : vector<2x128xf32> to vector<2x32xf32>
    %32 = vector.extract_strided_slice %29 {offsets = [0, 32], sizes = [2, 32], strides = [1, 1]} : vector<2x128xf32> to vector<2x32xf32>
    %33 = vector.extract_strided_slice %30 {offsets = [0, 64], sizes = [2, 32], strides = [1, 1]} : vector<2x128xf32> to vector<2x32xf32>
    %34 = vector.extract_strided_slice %29 {offsets = [0, 96], sizes = [2, 32], strides = [1, 1]} : vector<2x128xf32> to vector<2x32xf32>
    %35 = arith.mulf %32, %16 : vector<2x32xf32>
    %36 = arith.mulf %31, %33 : vector<2x32xf32>
    %37 = arith.addf %35, %36 : vector<2x32xf32>
    %38 = math.tanh %37 : vector<2x32xf32>
    %39 = arith.mulf %34, %38 : vector<2x32xf32>
    %c2_i32 = arith.constant 2 : i32
    %40 = arith.index_cast %c2_i32 : i32 to index
    %c0_14 = arith.constant 0 : index
    %c0_15 = arith.constant 0 : index
    %41 = vector.load %arg6[%40, %c0_14, %c0_15] : memref<8x2x128xf32, #tpu.memory_space<vmem>>, vector<1x2x128xf32>
    %42 = vector.shape_cast %41 : vector<1x2x128xf32> to vector<2x128xf32>
    %cst_16 = arith.constant dense<0.000000e+00> : vector<2x128xf32>
    %43 = tpu.matmul %39, %5, %cst_16 {dimension_numbers = #tpu.dot_dimension_numbers<[1], [0], [0], [1], [0, 0, 1, 1], [], []>} : vector<2x32xf32>, vector<32x128xf32>, vector<2x128xf32> -> vector<2x128xf32>
    %44 = arith.addf %42, %43 : vector<2x128xf32>
    %45 = arith.negf %44 : vector<2x128xf32>
    %46 = math.exp %45 : vector<2x128xf32>
    %cst_17 = arith.constant 1.000000e+00 : f32
    %47 = vector.broadcast %cst_17 : f32 to vector<2x128xf32>
    %48 = arith.addf %47, %46 : vector<2x128xf32>
    %49 = arith.divf %47, %48 : vector<2x128xf32>
    %50 = math.tanh %44 : vector<2x128xf32>
    %51 = vector.extract_strided_slice %49 {offsets = [0, 0], sizes = [2, 32], strides = [1, 1]} : vector<2x128xf32> to vector<2x32xf32>
    %52 = vector.extract_strided_slice %49 {offsets = [0, 32], sizes = [2, 32], strides = [1, 1]} : vector<2x128xf32> to vector<2x32xf32>
    %53 = vector.extract_strided_slice %50 {offsets = [0, 64], sizes = [2, 32], strides = [1, 1]} : vector<2x128xf32> to vector<2x32xf32>
    %54 = vector.extract_strided_slice %49 {offsets = [0, 96], sizes = [2, 32], strides = [1, 1]} : vector<2x128xf32> to vector<2x32xf32>
    %55 = arith.mulf %52, %37 : vector<2x32xf32>
    %56 = arith.mulf %51, %53 : vector<2x32xf32>
    %57 = arith.addf %55, %56 : vector<2x32xf32>
    %58 = math.tanh %57 : vector<2x32xf32>
    %59 = arith.mulf %54, %58 : vector<2x32xf32>
    %c3_i32 = arith.constant 3 : i32
    %60 = arith.index_cast %c3_i32 : i32 to index
    %c0_18 = arith.constant 0 : index
    %c0_19 = arith.constant 0 : index
    %61 = vector.load %arg6[%60, %c0_18, %c0_19] : memref<8x2x128xf32, #tpu.memory_space<vmem>>, vector<1x2x128xf32>
    %62 = vector.shape_cast %61 : vector<1x2x128xf32> to vector<2x128xf32>
    %cst_20 = arith.constant dense<0.000000e+00> : vector<2x128xf32>
    %63 = tpu.matmul %59, %5, %cst_20 {dimension_numbers = #tpu.dot_dimension_numbers<[1], [0], [0], [1], [0, 0, 1, 1], [], []>} : vector<2x32xf32>, vector<32x128xf32>, vector<2x128xf32> -> vector<2x128xf32>
    %64 = arith.addf %62, %63 : vector<2x128xf32>
    %65 = arith.negf %64 : vector<2x128xf32>
    %66 = math.exp %65 : vector<2x128xf32>
    %cst_21 = arith.constant 1.000000e+00 : f32
    %67 = vector.broadcast %cst_21 : f32 to vector<2x128xf32>
    %68 = arith.addf %67, %66 : vector<2x128xf32>
    %69 = arith.divf %67, %68 : vector<2x128xf32>
    %70 = math.tanh %64 : vector<2x128xf32>
    %71 = vector.extract_strided_slice %69 {offsets = [0, 0], sizes = [2, 32], strides = [1, 1]} : vector<2x128xf32> to vector<2x32xf32>
    %72 = vector.extract_strided_slice %69 {offsets = [0, 32], sizes = [2, 32], strides = [1, 1]} : vector<2x128xf32> to vector<2x32xf32>
    %73 = vector.extract_strided_slice %70 {offsets = [0, 64], sizes = [2, 32], strides = [1, 1]} : vector<2x128xf32> to vector<2x32xf32>
    %74 = vector.extract_strided_slice %69 {offsets = [0, 96], sizes = [2, 32], strides = [1, 1]} : vector<2x128xf32> to vector<2x32xf32>
    %75 = arith.mulf %72, %57 : vector<2x32xf32>
    %76 = arith.mulf %71, %73 : vector<2x32xf32>
    %77 = arith.addf %75, %76 : vector<2x32xf32>
    %78 = math.tanh %77 : vector<2x32xf32>
    %79 = arith.mulf %74, %78 : vector<2x32xf32>
    %c4_i32 = arith.constant 4 : i32
    %80 = arith.index_cast %c4_i32 : i32 to index
    %c0_22 = arith.constant 0 : index
    %c0_23 = arith.constant 0 : index
    %81 = vector.load %arg6[%80, %c0_22, %c0_23] : memref<8x2x128xf32, #tpu.memory_space<vmem>>, vector<1x2x128xf32>
    %82 = vector.shape_cast %81 : vector<1x2x128xf32> to vector<2x128xf32>
    %cst_24 = arith.constant dense<0.000000e+00> : vector<2x128xf32>
    %83 = tpu.matmul %79, %5, %cst_24 {dimension_numbers = #tpu.dot_dimension_numbers<[1], [0], [0], [1], [0, 0, 1, 1], [], []>} : vector<2x32xf32>, vector<32x128xf32>, vector<2x128xf32> -> vector<2x128xf32>
    %84 = arith.addf %82, %83 : vector<2x128xf32>
    %85 = arith.negf %84 : vector<2x128xf32>
    %86 = math.exp %85 : vector<2x128xf32>
    %cst_25 = arith.constant 1.000000e+00 : f32
    %87 = vector.broadcast %cst_25 : f32 to vector<2x128xf32>
    %88 = arith.addf %87, %86 : vector<2x128xf32>
    %89 = arith.divf %87, %88 : vector<2x128xf32>
    %90 = math.tanh %84 : vector<2x128xf32>
    %91 = vector.extract_strided_slice %89 {offsets = [0, 0], sizes = [2, 32], strides = [1, 1]} : vector<2x128xf32> to vector<2x32xf32>
    %92 = vector.extract_strided_slice %89 {offsets = [0, 32], sizes = [2, 32], strides = [1, 1]} : vector<2x128xf32> to vector<2x32xf32>
    %93 = vector.extract_strided_slice %90 {offsets = [0, 64], sizes = [2, 32], strides = [1, 1]} : vector<2x128xf32> to vector<2x32xf32>
    %94 = vector.extract_strided_slice %89 {offsets = [0, 96], sizes = [2, 32], strides = [1, 1]} : vector<2x128xf32> to vector<2x32xf32>
    %95 = arith.mulf %92, %77 : vector<2x32xf32>
    %96 = arith.mulf %91, %93 : vector<2x32xf32>
    %97 = arith.addf %95, %96 : vector<2x32xf32>
    %98 = math.tanh %97 : vector<2x32xf32>
    %99 = arith.mulf %94, %98 : vector<2x32xf32>
    %c5_i32 = arith.constant 5 : i32
    %100 = arith.index_cast %c5_i32 : i32 to index
    %c0_26 = arith.constant 0 : index
    %c0_27 = arith.constant 0 : index
    %101 = vector.load %arg6[%100, %c0_26, %c0_27] : memref<8x2x128xf32, #tpu.memory_space<vmem>>, vector<1x2x128xf32>
    %102 = vector.shape_cast %101 : vector<1x2x128xf32> to vector<2x128xf32>
    %cst_28 = arith.constant dense<0.000000e+00> : vector<2x128xf32>
    %103 = tpu.matmul %99, %5, %cst_28 {dimension_numbers = #tpu.dot_dimension_numbers<[1], [0], [0], [1], [0, 0, 1, 1], [], []>} : vector<2x32xf32>, vector<32x128xf32>, vector<2x128xf32> -> vector<2x128xf32>
    %104 = arith.addf %102, %103 : vector<2x128xf32>
    %105 = arith.negf %104 : vector<2x128xf32>
    %106 = math.exp %105 : vector<2x128xf32>
    %cst_29 = arith.constant 1.000000e+00 : f32
    %107 = vector.broadcast %cst_29 : f32 to vector<2x128xf32>
    %108 = arith.addf %107, %106 : vector<2x128xf32>
    %109 = arith.divf %107, %108 : vector<2x128xf32>
    %110 = math.tanh %104 : vector<2x128xf32>
    %111 = vector.extract_strided_slice %109 {offsets = [0, 0], sizes = [2, 32], strides = [1, 1]} : vector<2x128xf32> to vector<2x32xf32>
    %112 = vector.extract_strided_slice %109 {offsets = [0, 32], sizes = [2, 32], strides = [1, 1]} : vector<2x128xf32> to vector<2x32xf32>
    %113 = vector.extract_strided_slice %110 {offsets = [0, 64], sizes = [2, 32], strides = [1, 1]} : vector<2x128xf32> to vector<2x32xf32>
    %114 = vector.extract_strided_slice %109 {offsets = [0, 96], sizes = [2, 32], strides = [1, 1]} : vector<2x128xf32> to vector<2x32xf32>
    %115 = arith.mulf %112, %97 : vector<2x32xf32>
    %116 = arith.mulf %111, %113 : vector<2x32xf32>
    %117 = arith.addf %115, %116 : vector<2x32xf32>
    %118 = math.tanh %117 : vector<2x32xf32>
    %119 = arith.mulf %114, %118 : vector<2x32xf32>
    %c6_i32 = arith.constant 6 : i32
    %120 = arith.index_cast %c6_i32 : i32 to index
    %c0_30 = arith.constant 0 : index
    %c0_31 = arith.constant 0 : index
    %121 = vector.load %arg6[%120, %c0_30, %c0_31] : memref<8x2x128xf32, #tpu.memory_space<vmem>>, vector<1x2x128xf32>
    %122 = vector.shape_cast %121 : vector<1x2x128xf32> to vector<2x128xf32>
    %cst_32 = arith.constant dense<0.000000e+00> : vector<2x128xf32>
    %123 = tpu.matmul %119, %5, %cst_32 {dimension_numbers = #tpu.dot_dimension_numbers<[1], [0], [0], [1], [0, 0, 1, 1], [], []>} : vector<2x32xf32>, vector<32x128xf32>, vector<2x128xf32> -> vector<2x128xf32>
    %124 = arith.addf %122, %123 : vector<2x128xf32>
    %125 = arith.negf %124 : vector<2x128xf32>
    %126 = math.exp %125 : vector<2x128xf32>
    %cst_33 = arith.constant 1.000000e+00 : f32
    %127 = vector.broadcast %cst_33 : f32 to vector<2x128xf32>
    %128 = arith.addf %127, %126 : vector<2x128xf32>
    %129 = arith.divf %127, %128 : vector<2x128xf32>
    %130 = math.tanh %124 : vector<2x128xf32>
    %131 = vector.extract_strided_slice %129 {offsets = [0, 0], sizes = [2, 32], strides = [1, 1]} : vector<2x128xf32> to vector<2x32xf32>
    %132 = vector.extract_strided_slice %129 {offsets = [0, 32], sizes = [2, 32], strides = [1, 1]} : vector<2x128xf32> to vector<2x32xf32>
    %133 = vector.extract_strided_slice %130 {offsets = [0, 64], sizes = [2, 32], strides = [1, 1]} : vector<2x128xf32> to vector<2x32xf32>
    %134 = vector.extract_strided_slice %129 {offsets = [0, 96], sizes = [2, 32], strides = [1, 1]} : vector<2x128xf32> to vector<2x32xf32>
    %135 = arith.mulf %132, %117 : vector<2x32xf32>
    %136 = arith.mulf %131, %133 : vector<2x32xf32>
    %137 = arith.addf %135, %136 : vector<2x32xf32>
    %138 = math.tanh %137 : vector<2x32xf32>
    %139 = arith.mulf %134, %138 : vector<2x32xf32>
    %c7_i32 = arith.constant 7 : i32
    %140 = arith.index_cast %c7_i32 : i32 to index
    %c0_34 = arith.constant 0 : index
    %c0_35 = arith.constant 0 : index
    %141 = vector.load %arg6[%140, %c0_34, %c0_35] : memref<8x2x128xf32, #tpu.memory_space<vmem>>, vector<1x2x128xf32>
    %142 = vector.shape_cast %141 : vector<1x2x128xf32> to vector<2x128xf32>
    %cst_36 = arith.constant dense<0.000000e+00> : vector<2x128xf32>
    %143 = tpu.matmul %139, %5, %cst_36 {dimension_numbers = #tpu.dot_dimension_numbers<[1], [0], [0], [1], [0, 0, 1, 1], [], []>} : vector<2x32xf32>, vector<32x128xf32>, vector<2x128xf32> -> vector<2x128xf32>
    %144 = arith.addf %142, %143 : vector<2x128xf32>
    %145 = arith.negf %144 : vector<2x128xf32>
    %146 = math.exp %145 : vector<2x128xf32>
    %cst_37 = arith.constant 1.000000e+00 : f32
    %147 = vector.broadcast %cst_37 : f32 to vector<2x128xf32>
    %148 = arith.addf %147, %146 : vector<2x128xf32>
    %149 = arith.divf %147, %148 : vector<2x128xf32>
    %150 = math.tanh %144 : vector<2x128xf32>
    %151 = vector.extract_strided_slice %149 {offsets = [0, 0], sizes = [2, 32], strides = [1, 1]} : vector<2x128xf32> to vector<2x32xf32>
    %152 = vector.extract_strided_slice %149 {offsets = [0, 32], sizes = [2, 32], strides = [1, 1]} : vector<2x128xf32> to vector<2x32xf32>
    %153 = vector.extract_strided_slice %150 {offsets = [0, 64], sizes = [2, 32], strides = [1, 1]} : vector<2x128xf32> to vector<2x32xf32>
    %154 = vector.extract_strided_slice %149 {offsets = [0, 96], sizes = [2, 32], strides = [1, 1]} : vector<2x128xf32> to vector<2x32xf32>
    %155 = arith.mulf %152, %137 : vector<2x32xf32>
    %156 = arith.mulf %151, %153 : vector<2x32xf32>
    %157 = arith.addf %155, %156 : vector<2x32xf32>
    %158 = math.tanh %157 : vector<2x32xf32>
    %159 = arith.mulf %154, %158 : vector<2x32xf32>
    %c7_i32_38 = arith.constant 7 : i32
    %c0_39 = arith.constant 0 : index
    %c0_40 = arith.constant 0 : index
    %160 = vector.load %arg5[%c0_39, %c0_40] : memref<2x32xf32, #tpu.memory_space<vmem>>, vector<2x32xf32>
    tpu.vector_store %arg5[%c0_39, %c0_40], %159 {strides = array<i32>} : memref<2x32xf32, #tpu.memory_space<vmem>>, vector<2x32xf32>,
    return
  }
  func.func @transform_0(%arg0: i32) -> (i32, i32, i32) {
    %c0_i32 = arith.constant 0 : i32
    %c0_i32_0 = arith.constant 0 : i32
    %c0_i32_1 = arith.constant 0 : i32
    return %c0_i32, %arg0, %c0_i32_0 : i32, i32, i32
  }
  func.func @transform_1(%arg0: i32) -> (i32, i32) {
    %c0_i32 = arith.constant 0 : i32
    %c0_i32_0 = arith.constant 0 : i32
    %c0_i32_1 = arith.constant 0 : i32
    return %c0_i32, %c0_i32_0 : i32, i32
  }
  func.func @transform_2(%arg0: i32) -> (i32, i32) {
    %c0_i32 = arith.constant 0 : i32
    %c0_i32_0 = arith.constant 0 : i32
    %c0_i32_1 = arith.constant 0 : i32
    return %c0_i32, %c0_i32_0 : i32, i32
  }
  func.func @transform_3(%arg0: i32) -> (i32, i32) {
    %c0_i32 = arith.constant 0 : i32
    %c0_i32_0 = arith.constant 0 : i32
    %c0_i32_1 = arith.constant 0 : i32
    return %c0_i32, %c0_i32_0 : i32, i32
  }
  func.func @transform_4(%arg0: i32) -> (i32, i32) {
    %c0_i32 = arith.constant 0 : i32
    %c0_i32_0 = arith.constant 0 : i32
    return %arg0, %c0_i32 : i32, i32
  }
}

</mosaic_0001>

<llo_original>
// kernel: tpu_custom_call.1
$region0: #{tpu_custom_call.1}
  #allocation0 [shape = 'u32[]', space=smem, size = 0x4, offset = 0x4, fixed_abs, tag = 'smem constant byte address 0x4 - core index']
  #allocation1 [shape = 'u32[144,128]{1,0:T(1,128)}', space=vmem, size = 0x12000, scoped, tag = 'internal scratch']
  #allocation2 [shape = 'f32[8,2,128]{2,1,0:T(2,128)}', space=vmem, size = 0x2000, scoped, tag = 'scratch operand']
  %s0 = inlined_call_operand.hbm [shape: f32[8,2,16], index: 0, kind: input, shape index: {}]
  %s1 = inlined_call_operand.hbm [shape: f32[16,128], index: 1, kind: input, shape index: {}]
  %s2 = inlined_call_operand.hbm [shape: f32[32,128], index: 2, kind: input, shape index: {}]
  %s3 = inlined_call_operand.vmem [shape: f32[1,128], index: 3, kind: input, shape index: {}]
  %s4 = inlined_call_operand.hbm [shape: f32[2,32], index: 4, kind: output, shape index: {}]
  %s5 = sld [smem:[#allocation0]]
  $region45: #{tpu_custom_call.1} parent=0
    _
  %s7 = ssub.s32 1, %s5
  %s8 = scalar_select 0, %s7, %s5
  $region1: #{tpu_custom_call.1} parent=0
    #allocation3 [shape = 'u8[8192]{0}', space=vmem, size = 0x2000, scoped, tag = 'input window, operand 0, single buffered']
    #allocation4 [shape = 's32[1]{0}', space=sflag, size = 0x4, scoped, tag = 'scoped memory for tpu_custom_call.1']
    #allocation5 [shape = 's32[1]{0}', space=sflag, size = 0x4, scoped, tag = 'scoped memory for tpu_custom_call.1']
    #allocation6 [shape = 'u8[8192]{0}', space=vmem, size = 0x2000, scoped, tag = 'input window, operand 1, single buffered']
    #allocation7 [shape = 's32[1]{0}', space=sflag, size = 0x4, scoped, tag = 'scoped memory for tpu_custom_call.1']
    #allocation8 [shape = 'u8[16384]{0}', space=vmem, size = 0x4000, scoped, tag = 'input window, operand 2, single buffered']
    #allocation9 [shape = 'u8[1024]{0}', space=vmem, size = 0x400, scoped, tag = 'output window, operand 0, single buffered']
    %9 = vsyncpa [#allocation4], 0
    %10 = vsyncpa [#allocation7], 0
    %11 = vsyncpa [#allocation5], 0
    // Predicated region
    $region2: #{tpu_custom_call.1} parent=1 // pred_check
      _
    $region3: #{tpu_custom_call.1} parent=1 // pred_check_branch
      %13 = sbr.rel (0) target = $region5
    $region4: #{tpu_custom_call.1} parent=1 // pred_region
      %s15 = ssub.s32 256, 256
      %16 = vsyncadd [#allocation4], %s15
      %s17 = sshll.u32 [#allocation3], 4
      %s18 = int_to_ptr.vmem [resolvable:$true] %s17
      %23 = dma.hbm_to_vmem [thread:$0]  %s0, 256, %s18, [#allocation4], 32, 32, 2
    $region5: #{tpu_custom_call.1} parent=1 // pred_fallthru
      _
    // Predicated region
    $region6: #{tpu_custom_call.1} parent=1 // pred_check
      _
    $region7: #{tpu_custom_call.1} parent=1 // pred_check_branch
      %25 = sbr.rel (0) target = $region9
    $region8: #{tpu_custom_call.1} parent=1 // pred_region
      %s27 = ssub.s32 256, 256
      %28 = vsyncadd [#allocation7], %s27
      %s29 = sshll.u32 [#allocation6], 4
      %s30 = int_to_ptr.vmem [resolvable:$true] %s29
      %35 = dma.hbm_to_vmem [thread:$0]  %s1, 256, %s30, [#allocation7], 128, 128, 8
    $region9: #{tpu_custom_call.1} parent=1 // pred_fallthru
      _
    // Predicated region
    $region10: #{tpu_custom_call.1} parent=1 // pred_check
      _
    $region11: #{tpu_custom_call.1} parent=1 // pred_check_branch
      %37 = sbr.rel (0) target = $region13
    $region12: #{tpu_custom_call.1} parent=1 // pred_region
      %s39 = ssub.s32 512, 512
      %40 = vsyncadd [#allocation7], %s39
      %s41 = sshll.u32 [#allocation8], 4
      %s42 = int_to_ptr.vmem [resolvable:$true] %s41
      %47 = dma.hbm_to_vmem [thread:$0]  %s2, 512, %s42, [#allocation7], 128, 128, 8
    $region13: #{tpu_custom_call.1} parent=1 // pred_fallthru
      _
    // Predicated region
    $region14: #{tpu_custom_call.1} parent=1 // pred_check
      _
    $region15: #{tpu_custom_call.1} parent=1 // pred_check_branch
      %49 = sbr.rel (0) target = $region17
    $region16: #{tpu_custom_call.1} parent=1 // pred_region
      _
    $region17: #{tpu_custom_call.1} parent=1 // pred_fallthru
      _
    // Predicated region
    $region18: #{tpu_custom_call.1} parent=1 // pred_check
      _
    $region19: #{tpu_custom_call.1} parent=1 // pred_check_branch
      %51 = sbr.rel (0) target = $region21
    $region20: #{tpu_custom_call.1} parent=1 // pred_region
      %52 = dma.done [#allocation4], 256
    $region21: #{tpu_custom_call.1} parent=1 // pred_fallthru
      _
    // Predicated region
    $region22: #{tpu_custom_call.1} parent=1 // pred_check
      _
    $region23: #{tpu_custom_call.1} parent=1 // pred_check_branch
      %54 = sbr.rel (0) target = $region25
    $region24: #{tpu_custom_call.1} parent=1 // pred_region
      %55 = dma.done [#allocation7], 256
    $region25: #{tpu_custom_call.1} parent=1 // pred_fallthru
      _
    // Predicated region
    $region26: #{tpu_custom_call.1} parent=1 // pred_check
      _
    $region27: #{tpu_custom_call.1} parent=1 // pred_check_branch
      %57 = sbr.rel (0) target = $region29
    $region28: #{tpu_custom_call.1} parent=1 // pred_region
      %58 = dma.done [#allocation7], 512
    $region29: #{tpu_custom_call.1} parent=1 // pred_fallthru
      _
    %v59 = vld [vmem:[#allocation6] sm:$0xff]
    %v60 = vld [vmem:[#allocation6 + $0x8] sm:$0xff]
    %v61 = vld [vmem:[%s3] sm:$0x1]
    %v63 = vlaneseq
    %v64 = vshrl.u32 %v63, 7
    %v65 = vsub.s32 0, %v64
    %v66 = vrot.slane %v61, %v65
    loop: start=0, step=1, limit=8
    $region30: #{tpu_custom_call.1} parent=1 // loop_pre_header
      _
    $region31: #{tpu_custom_call.1} parent=1 // loop_header
      %s69 = sphi 0, %s73
      %p70 = scmp.ge.s32.totalorder %s69, 8
    $region32: #{tpu_custom_call.1} parent=1 // loop_header_branch
      %72 = sbr.rel (%p70) target = $region36
    $region33: #{tpu_custom_call.1} parent=1 // loop_body
      %s74 = smul.u32 %s69, 2
      %s75 = scalar_lea.vmem [#allocation3], %s74
      %v76 = vld [vmem:[%s75] sm:$0x3]
      %vm77 = vcmask 130048
      %v79 = vsel %vm77, %v76, 0
      %81 = vmatprep.subr.mxu0 0.0
      %82 = vmatpush1.msra.mxu0 0.0
      %83 = vmatprep.subr.mxu0 0.0
      %84 = vmatpush1.msra.mxu0 0.0
      %85 = vmatprep.subr.mxu0 0.0
      %86 = vmatpush1.msra.mxu0 0.0
      %87 = vmatprep.subr.mxu0 0.0
      %88 = vmatpush1.msra.mxu0 0.0
      %89 = vmatprep.subr.mxu0 0.0
      %90 = vmatpush1.msra.mxu0 0.0
      %91 = vmatprep.subr.mxu0 0.0
      %92 = vmatpush1.msra.mxu0 0.0
      %93 = vmatprep.subr.mxu0 0.0
      %94 = vmatpush1.msra.mxu0 0.0
      %95 = vmatprep.subr.mxu0 0.0
      %96 = vmatpush1.msra.mxu0 0.0
      %97 = vmatprep.subr.mxu0 0.0
      %98 = vmatpush1.msra.mxu0 0.0
      %99 = vmatprep.subr.mxu0 0.0
      %100 = vmatpush1.msra.mxu0 0.0
      %101 = vmatprep.subr.mxu0 0.0
      %102 = vmatpush1.msra.mxu0 0.0
      %103 = vmatprep.subr.mxu0 0.0
      %104 = vmatpush1.msra.mxu0 0.0
      %105 = vmatprep.subr.mxu0 0.0
      %106 = vmatpush1.msra.mxu0 0.0
      %107 = vmatprep.subr.mxu0 0.0
      %108 = vmatpush1.msra.mxu0 0.0
      %109 = vmatprep.subr.mxu0 0.0
      %110 = vmatpush1.msra.mxu0 %v60
      %111 = vmatprep.subr.mxu0 0.0
      %112 = vmatpush1.msra.mxu0 %v59
      %113 = vmatprep.subr.mxu0 0.0
      %114 = vmatpush2.msra.mxu0 0.0
      %115 = vmatprep.subr.mxu0 0.0
      %116 = vmatpush2.msra.mxu0 0.0
      %117 = vmatprep.subr.mxu0 0.0
      %118 = vmatpush2.msra.mxu0 0.0
      %119 = vmatprep.subr.mxu0 0.0
      %120 = vmatpush2.msra.mxu0 0.0
      %121 = vmatprep.subr.mxu0 0.0
      %122 = vmatpush2.msra.mxu0 0.0
      %123 = vmatprep.subr.mxu0 0.0
      %124 = vmatpush2.msra.mxu0 0.0
      %125 = vmatprep.subr.mxu0 0.0
      %126 = vmatpush2.msra.mxu0 0.0
      %127 = vmatprep.subr.mxu0 0.0
      %128 = vmatpush2.msra.mxu0 0.0
      %129 = vmatprep.subr.mxu0 0.0
      %130 = vmatpush2.msra.mxu0 0.0
      %131 = vmatprep.subr.mxu0 0.0
      %132 = vmatpush2.msra.mxu0 0.0
      %133 = vmatprep.subr.mxu0 0.0
      %134 = vmatpush2.msra.mxu0 0.0
      %135 = vmatprep.subr.mxu0 0.0
      %136 = vmatpush2.msra.mxu0 0.0
      %137 = vmatprep.subr.mxu0 0.0
      %138 = vmatpush2.msra.mxu0 0.0
      %139 = vmatprep.subr.mxu0 0.0
      %140 = vmatpush2.msra.mxu0 0.0
      %141 = vmatprep.subr.mxu0 0.0
      %142 = vmatpush2.msra.mxu0 0.0
      %143 = vmatprep.subr.mxu0 0.0
      %144 = vmatpush2.msra.mxu0 0.0
      %145 = vmatprep.mubr.f32.mxu0 0.0
      %146 = vmatmul.mubr.f32.gmra.mxu0 %v79
      %v147 = vpop.f32.mrf.mxu0
      %v148 = vadd.f32 %v66, %v147
      %v149 = vpop.f32.mrf.mxu0
      %150 = vdwg.mxu0
      %s151 = scalar_lea.vmem [#allocation2], %s74
      %152 = vst [vmem:[%s151] sm:$0x3] %v148
    $region34: #{tpu_custom_call.1} parent=1 // loop_footer
      %s73 = sadd.s32 1, %s69
    $region35: #{tpu_custom_call.1} parent=1 // loop_footer_branch
      %68 = sbr.rel target = $region31
    $region36: #{tpu_custom_call.1} parent=1 // loop_exit
      _
    %v153 = vld [vmem:[#allocation8] sm:$0xff]
    %v154 = vld [vmem:[#allocation8 + $0x8] sm:$0xff]
    %v155 = vld [vmem:[#allocation8 + $0x10] sm:$0xff]
    %v156 = vld [vmem:[#allocation8 + $0x18] sm:$0xff]
    %v157 = vld [vmem:[#allocation2] sm:$0x3]
    %v158 = vxor.u32 %v157, 2147483648
    %v159 = vmul.f32 %v158, 1.442695
    %v160 = vpow.pop %v159
    %v161 = vadd.f32 %v160, 1.0
    %v162 = vrcp.pop %v161
    %v163 = vmul.f32 1.0, %v162
    %v164 = vtanh.pop %v157
    %166 = vrot.lane.b32.xlu0 %v164, 64
    %v167 = vpop.permute.xlu0 %166
    %v169 = vmul.f32 %v163, %v167
    %v170 = vtanh.pop %v169
    %172 = vrot.lane.b32.xlu0 %v170, 96
    %v173 = vpop.permute.xlu0 %172
    %v175 = vmul.f32 %v163, %v173
    %s176 = scalar_lea.vmem [#allocation2], 2
    %v177 = vld [vmem:[%s176] sm:$0x3]
    %179 = vrot.lane.b32.xlu0 %v175, 32
    %v180 = vpop.permute.xlu0 %179
    %vm181 = vcmask 261120
    %v182 = vsel %vm181, %v180, 0
    %184 = vmatprep.subr.mxu0 0.0
    %185 = vmatpush1.msra.mxu0 0.0
    %186 = vmatprep.subr.mxu0 0.0
    %187 = vmatpush1.msra.mxu0 0.0
    %188 = vmatprep.subr.mxu0 0.0
    %189 = vmatpush1.msra.mxu0 0.0
    %190 = vmatprep.subr.mxu0 0.0
    %191 = vmatpush1.msra.mxu0 0.0
    %192 = vmatprep.subr.mxu0 0.0
    %193 = vmatpush1.msra.mxu0 0.0
    %194 = vmatprep.subr.mxu0 0.0
    %195 = vmatpush1.msra.mxu0 0.0
    %196 = vmatprep.subr.mxu0 0.0
    %197 = vmatpush1.msra.mxu0 0.0
    %198 = vmatprep.subr.mxu0 0.0
    %199 = vmatpush1.msra.mxu0 0.0
    %200 = vmatprep.subr.mxu0 0.0
    %201 = vmatpush1.msra.mxu0 0.0
    %202 = vmatprep.subr.mxu0 0.0
    %203 = vmatpush1.msra.mxu0 0.0
    %204 = vmatprep.subr.mxu0 0.0
    %205 = vmatpush1.msra.mxu0 0.0
    %206 = vmatprep.subr.mxu0 0.0
    %207 = vmatpush1.msra.mxu0 0.0
    %208 = vmatprep.subr.mxu0 0.0
    %209 = vmatpush1.msra.mxu0 %v156
    %210 = vmatprep.subr.mxu0 0.0
    %211 = vmatpush1.msra.mxu0 %v155
    %212 = vmatprep.subr.mxu0 0.0
    %213 = vmatpush1.msra.mxu0 %v154
    %214 = vmatprep.subr.mxu0 0.0
    %215 = vmatpush1.msra.mxu0 %v153
    %216 = vmatprep.subr.mxu0 0.0
    %217 = vmatpush2.msra.mxu0 0.0
    %218 = vmatprep.subr.mxu0 0.0
    %219 = vmatpush2.msra.mxu0 0.0
    %220 = vmatprep.subr.mxu0 0.0
    %221 = vmatpush2.msra.mxu0 0.0
    %222 = vmatprep.subr.mxu0 0.0
    %223 = vmatpush2.msra.mxu0 0.0
    %224 = vmatprep.subr.mxu0 0.0
    %225 = vmatpush2.msra.mxu0 0.0
    %226 = vmatprep.subr.mxu0 0.0
    %227 = vmatpush2.msra.mxu0 0.0
    %228 = vmatprep.subr.mxu0 0.0
    %229 = vmatpush2.msra.mxu0 0.0
    %230 = vmatprep.subr.mxu0 0.0
    %231 = vmatpush2.msra.mxu0 0.0
    %232 = vmatprep.subr.mxu0 0.0
    %233 = vmatpush2.msra.mxu0 0.0
    %234 = vmatprep.subr.mxu0 0.0
    %235 = vmatpush2.msra.mxu0 0.0
    %236 = vmatprep.subr.mxu0 0.0
    %237 = vmatpush2.msra.mxu0 0.0
    %238 = vmatprep.subr.mxu0 0.0
    %239 = vmatpush2.msra.mxu0 0.0
    %240 = vmatprep.subr.mxu0 0.0
    %241 = vmatpush2.msra.mxu0 0.0
    %242 = vmatprep.subr.mxu0 0.0
    %243 = vmatpush2.msra.mxu0 0.0
    %244 = vmatprep.subr.mxu0 0.0
    %245 = vmatpush2.msra.mxu0 0.0
    %246 = vmatprep.subr.mxu0 0.0
    %247 = vmatpush2.msra.mxu0 0.0
    %248 = vmatprep.mubr.f32.mxu0 0.0
    %249 = vmatmul.mubr.f32.gmra.mxu0 %v182
    %v250 = vpop.f32.mrf.mxu0
    %v251 = vadd.f32 0.0, %v250
    %v252 = vpop.f32.mrf.mxu0
    %253 = vdwg.mxu0
    %v254 = vadd.f32 %v177, %v251
    %v255 = vxor.u32 %v254, 2147483648
    %v256 = vmul.f32 %v255, 1.442695
    %v257 = vpow.pop %v256
    %v258 = vadd.f32 %v257, 1.0
    %v259 = vrcp.pop %v258
    %v260 = vmul.f32 1.0, %v259
    %v261 = vtanh.pop %v254
    %263 = vrot.lane.b32.xlu0 %v169, 32
    %v264 = vpop.permute.xlu0 %263
    %v266 = vmul.f32 %v260, %v264
    %268 = vrot.lane.b32.xlu0 %v261, 64
    %v269 = vpop.permute.xlu0 %268
    %v271 = vmul.f32 %v260, %v269
    %273 = vrot.lane.b32.xlu0 %v271, 32
    %v274 = vpop.permute.xlu0 %273
    %v276 = vadd.f32 %v266, %v274
    %v277 = vtanh.pop %v276
    %279 = vrot.lane.b32.xlu0 %v277, 64
    %v280 = vpop.permute.xlu0 %279
    %v282 = vmul.f32 %v260, %v280
    %s283 = scalar_lea.vmem [#allocation2], 4
    %v284 = vld [vmem:[%s283] sm:$0x3]
    %286 = vrot.lane.b32.xlu0 %v282, 32
    %v287 = vpop.permute.xlu0 %286
    %v288 = vsel %vm181, %v287, 0
    %290 = vmatprep.subr.mxu0 0.0
    %291 = vmatpush1.msra.mxu0 0.0
    %292 = vmatprep.subr.mxu0 0.0
    %293 = vmatpush1.msra.mxu0 0.0
    %294 = vmatprep.subr.mxu0 0.0
    %295 = vmatpush1.msra.mxu0 0.0
    %296 = vmatprep.subr.mxu0 0.0
    %297 = vmatpush1.msra.mxu0 0.0
    %298 = vmatprep.subr.mxu0 0.0
    %299 = vmatpush1.msra.mxu0 0.0
    %300 = vmatprep.subr.mxu0 0.0
    %301 = vmatpush1.msra.mxu0 0.0
    %302 = vmatprep.subr.mxu0 0.0
    %303 = vmatpush1.msra.mxu0 0.0
    %304 = vmatprep.subr.mxu0 0.0
    %305 = vmatpush1.msra.mxu0 0.0
    %306 = vmatprep.subr.mxu0 0.0
    %307 = vmatpush1.msra.mxu0 0.0
    %308 = vmatprep.subr.mxu0 0.0
    %309 = vmatpush1.msra.mxu0 0.0
    %310 = vmatprep.subr.mxu0 0.0
    %311 = vmatpush1.msra.mxu0 0.0
    %312 = vmatprep.subr.mxu0 0.0
    %313 = vmatpush1.msra.mxu0 0.0
    %314 = vmatprep.subr.mxu0 0.0
    %315 = vmatpush1.msra.mxu0 %v156
    %316 = vmatprep.subr.mxu0 0.0
    %317 = vmatpush1.msra.mxu0 %v155
    %318 = vmatprep.subr.mxu0 0.0
    %319 = vmatpush1.msra.mxu0 %v154
    %320 = vmatprep.subr.mxu0 0.0
    %321 = vmatpush1.msra.mxu0 %v153
    %322 = vmatprep.subr.mxu0 0.0
    %323 = vmatpush2.msra.mxu0 0.0
    %324 = vmatprep.subr.mxu0 0.0
    %325 = vmatpush2.msra.mxu0 0.0
    %326 = vmatprep.subr.mxu0 0.0
    %327 = vmatpush2.msra.mxu0 0.0
    %328 = vmatprep.subr.mxu0 0.0
    %329 = vmatpush2.msra.mxu0 0.0
    %330 = vmatprep.subr.mxu0 0.0
    %331 = vmatpush2.msra.mxu0 0.0
    %332 = vmatprep.subr.mxu0 0.0
    %333 = vmatpush2.msra.mxu0 0.0
    %334 = vmatprep.subr.mxu0 0.0
    %335 = vmatpush2.msra.mxu0 0.0
    %336 = vmatprep.subr.mxu0 0.0
    %337 = vmatpush2.msra.mxu0 0.0
    %338 = vmatprep.subr.mxu0 0.0
    %339 = vmatpush2.msra.mxu0 0.0
    %340 = vmatprep.subr.mxu0 0.0
    %341 = vmatpush2.msra.mxu0 0.0
    %342 = vmatprep.subr.mxu0 0.0
    %343 = vmatpush2.msra.mxu0 0.0
    %344 = vmatprep.subr.mxu0 0.0
    %345 = vmatpush2.msra.mxu0 0.0
    %346 = vmatprep.subr.mxu0 0.0
    %347 = vmatpush2.msra.mxu0 0.0
    %348 = vmatprep.subr.mxu0 0.0
    %349 = vmatpush2.msra.mxu0 0.0
    %350 = vmatprep.subr.mxu0 0.0
    %351 = vmatpush2.msra.mxu0 0.0
    %352 = vmatprep.subr.mxu0 0.0
    %353 = vmatpush2.msra.mxu0 0.0
    %354 = vmatprep.mubr.f32.mxu0 0.0
    %355 = vmatmul.mubr.f32.gmra.mxu0 %v288
    %v356 = vpop.f32.mrf.mxu0
    %v357 = vadd.f32 0.0, %v356
    %v358 = vpop.f32.mrf.mxu0
    %359 = vdwg.mxu0
    %v360 = vadd.f32 %v284, %v357
    %v361 = vxor.u32 %v360, 2147483648
    %v362 = vmul.f32 %v361, 1.442695
    %v363 = vpow.pop %v362
    %v364 = vadd.f32 %v363, 1.0
    %v365 = vrcp.pop %v364
    %v366 = vmul.f32 1.0, %v365
    %v367 = vtanh.pop %v360
    %v368 = vmul.f32 %v366, %v276
    %370 = vrot.lane.b32.xlu0 %v367, 64
    %v371 = vpop.permute.xlu0 %370
    %v373 = vmul.f32 %v366, %v371
    %375 = vrot.lane.b32.xlu0 %v373, 32
    %v376 = vpop.permute.xlu0 %375
    %v378 = vadd.f32 %v368, %v376
    %v379 = vtanh.pop %v378
    %381 = vrot.lane.b32.xlu0 %v379, 64
    %v382 = vpop.permute.xlu0 %381
    %v384 = vmul.f32 %v366, %v382
    %s385 = scalar_lea.vmem [#allocation2], 6
    %v386 = vld [vmem:[%s385] sm:$0x3]
    %388 = vrot.lane.b32.xlu0 %v384, 32
    %v389 = vpop.permute.xlu0 %388
    %v390 = vsel %vm181, %v389, 0
    %392 = vmatprep.subr.mxu0 0.0
    %393 = vmatpush1.msra.mxu0 0.0
    %394 = vmatprep.subr.mxu0 0.0
    %395 = vmatpush1.msra.mxu0 0.0
    %396 = vmatprep.subr.mxu0 0.0
    %397 = vmatpush1.msra.mxu0 0.0
    %398 = vmatprep.subr.mxu0 0.0
    %399 = vmatpush1.msra.mxu0 0.0
    %400 = vmatprep.subr.mxu0 0.0
    %401 = vmatpush1.msra.mxu0 0.0
    %402 = vmatprep.subr.mxu0 0.0
    %403 = vmatpush1.msra.mxu0 0.0
    %404 = vmatprep.subr.mxu0 0.0
    %405 = vmatpush1.msra.mxu0 0.0
    %406 = vmatprep.subr.mxu0 0.0
    %407 = vmatpush1.msra.mxu0 0.0
    %408 = vmatprep.subr.mxu0 0.0
    %409 = vmatpush1.msra.mxu0 0.0
    %410 = vmatprep.subr.mxu0 0.0
    %411 = vmatpush1.msra.mxu0 0.0
    %412 = vmatprep.subr.mxu0 0.0
    %413 = vmatpush1.msra.mxu0 0.0
    %414 = vmatprep.subr.mxu0 0.0
    %415 = vmatpush1.msra.mxu0 0.0
    %416 = vmatprep.subr.mxu0 0.0
    %417 = vmatpush1.msra.mxu0 %v156
    %418 = vmatprep.subr.mxu0 0.0
    %419 = vmatpush1.msra.mxu0 %v155
    %420 = vmatprep.subr.mxu0 0.0
    %421 = vmatpush1.msra.mxu0 %v154
    %422 = vmatprep.subr.mxu0 0.0
    %423 = vmatpush1.msra.mxu0 %v153
    %424 = vmatprep.subr.mxu0 0.0
    %425 = vmatpush2.msra.mxu0 0.0
    %426 = vmatprep.subr.mxu0 0.0
    %427 = vmatpush2.msra.mxu0 0.0
    %428 = vmatprep.subr.mxu0 0.0
    %429 = vmatpush2.msra.mxu0 0.0
    %430 = vmatprep.subr.mxu0 0.0
    %431 = vmatpush2.msra.mxu0 0.0
    %432 = vmatprep.subr.mxu0 0.0
    %433 = vmatpush2.msra.mxu0 0.0
    %434 = vmatprep.subr.mxu0 0.0
    %435 = vmatpush2.msra.mxu0 0.0
    %436 = vmatprep.subr.mxu0 0.0
    %437 = vmatpush2.msra.mxu0 0.0
    %438 = vmatprep.subr.mxu0 0.0
    %439 = vmatpush2.msra.mxu0 0.0
    %440 = vmatprep.subr.mxu0 0.0
    %441 = vmatpush2.msra.mxu0 0.0
    %442 = vmatprep.subr.mxu0 0.0
    %443 = vmatpush2.msra.mxu0 0.0
    %444 = vmatprep.subr.mxu0 0.0
    %445 = vmatpush2.msra.mxu0 0.0
    %446 = vmatprep.subr.mxu0 0.0
    %447 = vmatpush2.msra.mxu0 0.0
    %448 = vmatprep.subr.mxu0 0.0
    %449 = vmatpush2.msra.mxu0 0.0
    %450 = vmatprep.subr.mxu0 0.0
    %451 = vmatpush2.msra.mxu0 0.0
    %452 = vmatprep.subr.mxu0 0.0
    %453 = vmatpush2.msra.mxu0 0.0
    %454 = vmatprep.subr.mxu0 0.0
    %455 = vmatpush2.msra.mxu0 0.0
    %456 = vmatprep.mubr.f32.mxu0 0.0
    %457 = vmatmul.mubr.f32.gmra.mxu0 %v390
    %v458 = vpop.f32.mrf.mxu0
    %v459 = vadd.f32 0.0, %v458
    %v460 = vpop.f32.mrf.mxu0
    %461 = vdwg.mxu0
    %v462 = vadd.f32 %v386, %v459
    %v463 = vxor.u32 %v462, 2147483648
    %v464 = vmul.f32 %v463, 1.442695
    %v465 = vpow.pop %v464
    %v466 = vadd.f32 %v465, 1.0
    %v467 = vrcp.pop %v466
    %v468 = vmul.f32 1.0, %v467
    %v469 = vtanh.pop %v462
    %v470 = vmul.f32 %v468, %v378
    %472 = vrot.lane.b32.xlu0 %v469, 64
    %v473 = vpop.permute.xlu0 %472
    %v475 = vmul.f32 %v468, %v473
    %477 = vrot.lane.b32.xlu0 %v475, 32
    %v478 = vpop.permute.xlu0 %477
    %v480 = vadd.f32 %v470, %v478
    %v481 = vtanh.pop %v480
    %483 = vrot.lane.b32.xlu0 %v481, 64
    %v484 = vpop.permute.xlu0 %483
    %v486 = vmul.f32 %v468, %v484
    %s487 = scalar_lea.vmem [#allocation2], 8
    %v488 = vld [vmem:[%s487] sm:$0x3]
    %490 = vrot.lane.b32.xlu0 %v486, 32
    %v491 = vpop.permute.xlu0 %490
    %v492 = vsel %vm181, %v491, 0
    %494 = vmatprep.subr.mxu0 0.0
    %495 = vmatpush1.msra.mxu0 0.0
    %496 = vmatprep.subr.mxu0 0.0
    %497 = vmatpush1.msra.mxu0 0.0
    %498 = vmatprep.subr.mxu0 0.0
    %499 = vmatpush1.msra.mxu0 0.0
    %500 = vmatprep.subr.mxu0 0.0
    %501 = vmatpush1.msra.mxu0 0.0
    %502 = vmatprep.subr.mxu0 0.0
    %503 = vmatpush1.msra.mxu0 0.0
    %504 = vmatprep.subr.mxu0 0.0
    %505 = vmatpush1.msra.mxu0 0.0
    %506 = vmatprep.subr.mxu0 0.0
    %507 = vmatpush1.msra.mxu0 0.0
    %508 = vmatprep.subr.mxu0 0.0
    %509 = vmatpush1.msra.mxu0 0.0
    %510 = vmatprep.subr.mxu0 0.0
    %511 = vmatpush1.msra.mxu0 0.0
    %512 = vmatprep.subr.mxu0 0.0
    %513 = vmatpush1.msra.mxu0 0.0
    %514 = vmatprep.subr.mxu0 0.0
    %515 = vmatpush1.msra.mxu0 0.0
    %516 = vmatprep.subr.mxu0 0.0
    %517 = vmatpush1.msra.mxu0 0.0
    %518 = vmatprep.subr.mxu0 0.0
    %519 = vmatpush1.msra.mxu0 %v156
    %520 = vmatprep.subr.mxu0 0.0
    %521 = vmatpush1.msra.mxu0 %v155
    %522 = vmatprep.subr.mxu0 0.0
    %523 = vmatpush1.msra.mxu0 %v154
    %524 = vmatprep.subr.mxu0 0.0
    %525 = vmatpush1.msra.mxu0 %v153
    %526 = vmatprep.subr.mxu0 0.0
    %527 = vmatpush2.msra.mxu0 0.0
    %528 = vmatprep.subr.mxu0 0.0
    %529 = vmatpush2.msra.mxu0 0.0
    %530 = vmatprep.subr.mxu0 0.0
    %531 = vmatpush2.msra.mxu0 0.0
    %532 = vmatprep.subr.mxu0 0.0
    %533 = vmatpush2.msra.mxu0 0.0
    %534 = vmatprep.subr.mxu0 0.0
    %535 = vmatpush2.msra.mxu0 0.0
    %536 = vmatprep.subr.mxu0 0.0
    %537 = vmatpush2.msra.mxu0 0.0
    %538 = vmatprep.subr.mxu0 0.0
    %539 = vmatpush2.msra.mxu0 0.0
    %540 = vmatprep.subr.mxu0 0.0
    %541 = vmatpush2.msra.mxu0 0.0
    %542 = vmatprep.subr.mxu0 0.0
    %543 = vmatpush2.msra.mxu0 0.0
    %544 = vmatprep.subr.mxu0 0.0
    %545 = vmatpush2.msra.mxu0 0.0
    %546 = vmatprep.subr.mxu0 0.0
    %547 = vmatpush2.msra.mxu0 0.0
    %548 = vmatprep.subr.mxu0 0.0
    %549 = vmatpush2.msra.mxu0 0.0
    %550 = vmatprep.subr.mxu0 0.0
    %551 = vmatpush2.msra.mxu0 0.0
    %552 = vmatprep.subr.mxu0 0.0
    %553 = vmatpush2.msra.mxu0 0.0
    %554 = vmatprep.subr.mxu0 0.0
    %555 = vmatpush2.msra.mxu0 0.0
    %556 = vmatprep.subr.mxu0 0.0
    %557 = vmatpush2.msra.mxu0 0.0
    %558 = vmatprep.mubr.f32.mxu0 0.0
    %559 = vmatmul.mubr.f32.gmra.mxu0 %v492
    %v560 = vpop.f32.mrf.mxu0
    %v561 = vadd.f32 0.0, %v560
    %v562 = vpop.f32.mrf.mxu0
    %563 = vdwg.mxu0
    %v564 = vadd.f32 %v488, %v561
    %v565 = vxor.u32 %v564, 2147483648
    %v566 = vmul.f32 %v565, 1.442695
    %v567 = vpow.pop %v566
    %v568 = vadd.f32 %v567, 1.0
    %v569 = vrcp.pop %v568
    %v570 = vmul.f32 1.0, %v569
    %v571 = vtanh.pop %v564
    %v572 = vmul.f32 %v570, %v480
    %574 = vrot.lane.b32.xlu0 %v571, 64
    %v575 = vpop.permute.xlu0 %574
    %v577 = vmul.f32 %v570, %v575
    %579 = vrot.lane.b32.xlu0 %v577, 32
    %v580 = vpop.permute.xlu0 %579
    %v582 = vadd.f32 %v572, %v580
    %v583 = vtanh.pop %v582
    %585 = vrot.lane.b32.xlu0 %v583, 64
    %v586 = vpop.permute.xlu0 %585
    %v588 = vmul.f32 %v570, %v586
    %s589 = scalar_lea.vmem [#allocation2], 10
    %v590 = vld [vmem:[%s589] sm:$0x3]
    %592 = vrot.lane.b32.xlu0 %v588, 32
    %v593 = vpop.permute.xlu0 %592
    %v594 = vsel %vm181, %v593, 0
    %596 = vmatprep.subr.mxu0 0.0
    %597 = vmatpush1.msra.mxu0 0.0
    %598 = vmatprep.subr.mxu0 0.0
    %599 = vmatpush1.msra.mxu0 0.0
    %600 = vmatprep.subr.mxu0 0.0
    %601 = vmatpush1.msra.mxu0 0.0
    %602 = vmatprep.subr.mxu0 0.0
    %603 = vmatpush1.msra.mxu0 0.0
    %604 = vmatprep.subr.mxu0 0.0
    %605 = vmatpush1.msra.mxu0 0.0
    %606 = vmatprep.subr.mxu0 0.0
    %607 = vmatpush1.msra.mxu0 0.0
    %608 = vmatprep.subr.mxu0 0.0
    %609 = vmatpush1.msra.mxu0 0.0
    %610 = vmatprep.subr.mxu0 0.0
    %611 = vmatpush1.msra.mxu0 0.0
    %612 = vmatprep.subr.mxu0 0.0
    %613 = vmatpush1.msra.mxu0 0.0
    %614 = vmatprep.subr.mxu0 0.0
    %615 = vmatpush1.msra.mxu0 0.0
    %616 = vmatprep.subr.mxu0 0.0
    %617 = vmatpush1.msra.mxu0 0.0
    %618 = vmatprep.subr.mxu0 0.0
    %619 = vmatpush1.msra.mxu0 0.0
    %620 = vmatprep.subr.mxu0 0.0
    %621 = vmatpush1.msra.mxu0 %v156
    %622 = vmatprep.subr.mxu0 0.0
    %623 = vmatpush1.msra.mxu0 %v155
    %624 = vmatprep.subr.mxu0 0.0
    %625 = vmatpush1.msra.mxu0 %v154
    %626 = vmatprep.subr.mxu0 0.0
    %627 = vmatpush1.msra.mxu0 %v153
    %628 = vmatprep.subr.mxu0 0.0
    %629 = vmatpush2.msra.mxu0 0.0
    %630 = vmatprep.subr.mxu0 0.0
    %631 = vmatpush2.msra.mxu0 0.0
    %632 = vmatprep.subr.mxu0 0.0
    %633 = vmatpush2.msra.mxu0 0.0
    %634 = vmatprep.subr.mxu0 0.0
    %635 = vmatpush2.msra.mxu0 0.0
    %636 = vmatprep.subr.mxu0 0.0
    %637 = vmatpush2.msra.mxu0 0.0
    %638 = vmatprep.subr.mxu0 0.0
    %639 = vmatpush2.msra.mxu0 0.0
    %640 = vmatprep.subr.mxu0 0.0
    %641 = vmatpush2.msra.mxu0 0.0
    %642 = vmatprep.subr.mxu0 0.0
    %643 = vmatpush2.msra.mxu0 0.0
    %644 = vmatprep.subr.mxu0 0.0
    %645 = vmatpush2.msra.mxu0 0.0
    %646 = vmatprep.subr.mxu0 0.0
    %647 = vmatpush2.msra.mxu0 0.0
    %648 = vmatprep.subr.mxu0 0.0
    %649 = vmatpush2.msra.mxu0 0.0
    %650 = vmatprep.subr.mxu0 0.0
    %651 = vmatpush2.msra.mxu0 0.0
    %652 = vmatprep.subr.mxu0 0.0
    %653 = vmatpush2.msra.mxu0 0.0
    %654 = vmatprep.subr.mxu0 0.0
    %655 = vmatpush2.msra.mxu0 0.0
    %656 = vmatprep.subr.mxu0 0.0
    %657 = vmatpush2.msra.mxu0 0.0
    %658 = vmatprep.subr.mxu0 0.0
    %659 = vmatpush2.msra.mxu0 0.0
    %660 = vmatprep.mubr.f32.mxu0 0.0
    %661 = vmatmul.mubr.f32.gmra.mxu0 %v594
    %v662 = vpop.f32.mrf.mxu0
    %v663 = vadd.f32 0.0, %v662
    %v664 = vpop.f32.mrf.mxu0
    %665 = vdwg.mxu0
    %v666 = vadd.f32 %v590, %v663
    %v667 = vxor.u32 %v666, 2147483648
    %v668 = vmul.f32 %v667, 1.442695
    %v669 = vpow.pop %v668
    %v670 = vadd.f32 %v669, 1.0
    %v671 = vrcp.pop %v670
    %v672 = vmul.f32 1.0, %v671
    %v673 = vtanh.pop %v666
    %v674 = vmul.f32 %v672, %v582
    %676 = vrot.lane.b32.xlu0 %v673, 64
    %v677 = vpop.permute.xlu0 %676
    %v679 = vmul.f32 %v672, %v677
    %681 = vrot.lane.b32.xlu0 %v679, 32
    %v682 = vpop.permute.xlu0 %681
    %v684 = vadd.f32 %v674, %v682
    %v685 = vtanh.pop %v684
    %687 = vrot.lane.b32.xlu0 %v685, 64
    %v688 = vpop.permute.xlu0 %687
    %v690 = vmul.f32 %v672, %v688
    %s691 = scalar_lea.vmem [#allocation2], 12
    %v692 = vld [vmem:[%s691] sm:$0x3]
    %694 = vrot.lane.b32.xlu0 %v690, 32
    %v695 = vpop.permute.xlu0 %694
    %v696 = vsel %vm181, %v695, 0
    %698 = vmatprep.subr.mxu0 0.0
    %699 = vmatpush1.msra.mxu0 0.0
    %700 = vmatprep.subr.mxu0 0.0
    %701 = vmatpush1.msra.mxu0 0.0
    %702 = vmatprep.subr.mxu0 0.0
    %703 = vmatpush1.msra.mxu0 0.0
    %704 = vmatprep.subr.mxu0 0.0
    %705 = vmatpush1.msra.mxu0 0.0
    %706 = vmatprep.subr.mxu0 0.0
    %707 = vmatpush1.msra.mxu0 0.0
    %708 = vmatprep.subr.mxu0 0.0
    %709 = vmatpush1.msra.mxu0 0.0
    %710 = vmatprep.subr.mxu0 0.0
    %711 = vmatpush1.msra.mxu0 0.0
    %712 = vmatprep.subr.mxu0 0.0
    %713 = vmatpush1.msra.mxu0 0.0
    %714 = vmatprep.subr.mxu0 0.0
    %715 = vmatpush1.msra.mxu0 0.0
    %716 = vmatprep.subr.mxu0 0.0
    %717 = vmatpush1.msra.mxu0 0.0
    %718 = vmatprep.subr.mxu0 0.0
    %719 = vmatpush1.msra.mxu0 0.0
    %720 = vmatprep.subr.mxu0 0.0
    %721 = vmatpush1.msra.mxu0 0.0
    %722 = vmatprep.subr.mxu0 0.0
    %723 = vmatpush1.msra.mxu0 %v156
    %724 = vmatprep.subr.mxu0 0.0
    %725 = vmatpush1.msra.mxu0 %v155
    %726 = vmatprep.subr.mxu0 0.0
    %727 = vmatpush1.msra.mxu0 %v154
    %728 = vmatprep.subr.mxu0 0.0
    %729 = vmatpush1.msra.mxu0 %v153
    %730 = vmatprep.subr.mxu0 0.0
    %731 = vmatpush2.msra.mxu0 0.0
    %732 = vmatprep.subr.mxu0 0.0
    %733 = vmatpush2.msra.mxu0 0.0
    %734 = vmatprep.subr.mxu0 0.0
    %735 = vmatpush2.msra.mxu0 0.0
    %736 = vmatprep.subr.mxu0 0.0
    %737 = vmatpush2.msra.mxu0 0.0
    %738 = vmatprep.subr.mxu0 0.0
    %739 = vmatpush2.msra.mxu0 0.0
    %740 = vmatprep.subr.mxu0 0.0
    %741 = vmatpush2.msra.mxu0 0.0
    %742 = vmatprep.subr.mxu0 0.0
    %743 = vmatpush2.msra.mxu0 0.0
    %744 = vmatprep.subr.mxu0 0.0
    %745 = vmatpush2.msra.mxu0 0.0
    %746 = vmatprep.subr.mxu0 0.0
    %747 = vmatpush2.msra.mxu0 0.0
    %748 = vmatprep.subr.mxu0 0.0
    %749 = vmatpush2.msra.mxu0 0.0
    %750 = vmatprep.subr.mxu0 0.0
    %751 = vmatpush2.msra.mxu0 0.0
    %752 = vmatprep.subr.mxu0 0.0
    %753 = vmatpush2.msra.mxu0 0.0
    %754 = vmatprep.subr.mxu0 0.0
    %755 = vmatpush2.msra.mxu0 0.0
    %756 = vmatprep.subr.mxu0 0.0
    %757 = vmatpush2.msra.mxu0 0.0
    %758 = vmatprep.subr.mxu0 0.0
    %759 = vmatpush2.msra.mxu0 0.0
    %760 = vmatprep.subr.mxu0 0.0
    %761 = vmatpush2.msra.mxu0 0.0
    %762 = vmatprep.mubr.f32.mxu0 0.0
    %763 = vmatmul.mubr.f32.gmra.mxu0 %v696
    %v764 = vpop.f32.mrf.mxu0
    %v765 = vadd.f32 0.0, %v764
    %v766 = vpop.f32.mrf.mxu0
    %767 = vdwg.mxu0
    %v768 = vadd.f32 %v692, %v765
    %v769 = vxor.u32 %v768, 2147483648
    %v770 = vmul.f32 %v769, 1.442695
    %v771 = vpow.pop %v770
    %v772 = vadd.f32 %v771, 1.0
    %v773 = vrcp.pop %v772
    %v774 = vmul.f32 1.0, %v773
    %v775 = vtanh.pop %v768
    %v776 = vmul.f32 %v774, %v684
    %778 = vrot.lane.b32.xlu0 %v775, 64
    %v779 = vpop.permute.xlu0 %778
    %v781 = vmul.f32 %v774, %v779
    %783 = vrot.lane.b32.xlu0 %v781, 32
    %v784 = vpop.permute.xlu0 %783
    %v786 = vadd.f32 %v776, %v784
    %v787 = vtanh.pop %v786
    %789 = vrot.lane.b32.xlu0 %v787, 64
    %v790 = vpop.permute.xlu0 %789
    %v792 = vmul.f32 %v774, %v790
    %s793 = scalar_lea.vmem [#allocation2], 14
    %v794 = vld [vmem:[%s793] sm:$0x3]
    %796 = vrot.lane.b32.xlu0 %v792, 32
    %v797 = vpop.permute.xlu0 %796
    %v798 = vsel %vm181, %v797, 0
    %800 = vmatprep.subr.mxu0 0.0
    %801 = vmatpush1.msra.mxu0 0.0
    %802 = vmatprep.subr.mxu0 0.0
    %803 = vmatpush1.msra.mxu0 0.0
    %804 = vmatprep.subr.mxu0 0.0
    %805 = vmatpush1.msra.mxu0 0.0
    %806 = vmatprep.subr.mxu0 0.0
    %807 = vmatpush1.msra.mxu0 0.0
    %808 = vmatprep.subr.mxu0 0.0
    %809 = vmatpush1.msra.mxu0 0.0
    %810 = vmatprep.subr.mxu0 0.0
    %811 = vmatpush1.msra.mxu0 0.0
    %812 = vmatprep.subr.mxu0 0.0
    %813 = vmatpush1.msra.mxu0 0.0
    %814 = vmatprep.subr.mxu0 0.0
    %815 = vmatpush1.msra.mxu0 0.0
    %816 = vmatprep.subr.mxu0 0.0
    %817 = vmatpush1.msra.mxu0 0.0
    %818 = vmatprep.subr.mxu0 0.0
    %819 = vmatpush1.msra.mxu0 0.0
    %820 = vmatprep.subr.mxu0 0.0
    %821 = vmatpush1.msra.mxu0 0.0
    %822 = vmatprep.subr.mxu0 0.0
    %823 = vmatpush1.msra.mxu0 0.0
    %824 = vmatprep.subr.mxu0 0.0
    %825 = vmatpush1.msra.mxu0 %v156
    %826 = vmatprep.subr.mxu0 0.0
    %827 = vmatpush1.msra.mxu0 %v155
    %828 = vmatprep.subr.mxu0 0.0
    %829 = vmatpush1.msra.mxu0 %v154
    %830 = vmatprep.subr.mxu0 0.0
    %831 = vmatpush1.msra.mxu0 %v153
    %832 = vmatprep.subr.mxu0 0.0
    %833 = vmatpush2.msra.mxu0 0.0
    %834 = vmatprep.subr.mxu0 0.0
    %835 = vmatpush2.msra.mxu0 0.0
    %836 = vmatprep.subr.mxu0 0.0
    %837 = vmatpush2.msra.mxu0 0.0
    %838 = vmatprep.subr.mxu0 0.0
    %839 = vmatpush2.msra.mxu0 0.0
    %840 = vmatprep.subr.mxu0 0.0
    %841 = vmatpush2.msra.mxu0 0.0
    %842 = vmatprep.subr.mxu0 0.0
    %843 = vmatpush2.msra.mxu0 0.0
    %844 = vmatprep.subr.mxu0 0.0
    %845 = vmatpush2.msra.mxu0 0.0
    %846 = vmatprep.subr.mxu0 0.0
    %847 = vmatpush2.msra.mxu0 0.0
    %848 = vmatprep.subr.mxu0 0.0
    %849 = vmatpush2.msra.mxu0 0.0
    %850 = vmatprep.subr.mxu0 0.0
    %851 = vmatpush2.msra.mxu0 0.0
    %852 = vmatprep.subr.mxu0 0.0
    %853 = vmatpush2.msra.mxu0 0.0
    %854 = vmatprep.subr.mxu0 0.0
    %855 = vmatpush2.msra.mxu0 0.0
    %856 = vmatprep.subr.mxu0 0.0
    %857 = vmatpush2.msra.mxu0 0.0
    %858 = vmatprep.subr.mxu0 0.0
    %859 = vmatpush2.msra.mxu0 0.0
    %860 = vmatprep.subr.mxu0 0.0
    %861 = vmatpush2.msra.mxu0 0.0
    %862 = vmatprep.subr.mxu0 0.0
    %863 = vmatpush2.msra.mxu0 0.0
    %864 = vmatprep.mubr.f32.mxu0 0.0
    %865 = vmatmul.mubr.f32.gmra.mxu0 %v798
    %v866 = vpop.f32.mrf.mxu0
    %v867 = vadd.f32 0.0, %v866
    %v868 = vpop.f32.mrf.mxu0
    %869 = vdwg.mxu0
    %v870 = vadd.f32 %v794, %v867
    %v871 = vxor.u32 %v870, 2147483648
    %v872 = vmul.f32 %v871, 1.442695
    %v873 = vpow.pop %v872
    %v874 = vadd.f32 %v873, 1.0
    %v875 = vrcp.pop %v874
    %v876 = vmul.f32 1.0, %v875
    %v877 = vtanh.pop %v870
    %v878 = vmul.f32 %v876, %v786
    %880 = vrot.lane.b32.xlu0 %v877, 64
    %v881 = vpop.permute.xlu0 %880
    %v883 = vmul.f32 %v876, %v881
    %885 = vrot.lane.b32.xlu0 %v883, 32
    %v886 = vpop.permute.xlu0 %885
    %v888 = vadd.f32 %v878, %v886
    %v889 = vtanh.pop %v888
    %891 = vrot.lane.b32.xlu0 %v889, 64
    %v892 = vpop.permute.xlu0 %891
    %v894 = vmul.f32 %v876, %v892
    %896 = vrot.lane.b32.xlu0 %v894, 32
    %v897 = vpop.permute.xlu0 %896
    %vm899 = vcmask 254976
    %900 = vst.msk [vmem:[#allocation9] sm:$0x3] %vm899, %v897
    // Predicated region
    $region37: #{tpu_custom_call.1} parent=1 // pred_check
      _
    $region38: #{tpu_custom_call.1} parent=1 // pred_check_branch
      %902 = sbr.rel (0) target = $region40
    $region39: #{tpu_custom_call.1} parent=1 // pred_region
      %s904 = ssub.s32 32, 32
      %905 = vsyncadd [#allocation5], %s904
      %s907 = sshll.u32 [#allocation9], 4
      %s908 = int_to_ptr.vmem [resolvable:$true] %s907
      %910 = dma.vmem_to_hbm [thread:$0]  %s908, 32, %s4, [#allocation5]
    $region40: #{tpu_custom_call.1} parent=1 // pred_fallthru
      _
    // Predicated region
    $region41: #{tpu_custom_call.1} parent=1 // pred_check
      _
    $region42: #{tpu_custom_call.1} parent=1 // pred_check_branch
      %912 = sbr.rel (0) target = $region44
    $region43: #{tpu_custom_call.1} parent=1 // pred_region
      %913 = dma.done [#allocation5], 32
    $region44: #{tpu_custom_call.1} parent=1 // pred_fallthru
      _
    %914 = vsyncpa [#allocation4], 1
    %915 = vsyncpa [#allocation7], 1
    %916 = vsyncpa [#allocation5], 1

</llo_original>
